<compile_context>
chip_gen: v7x
topology: tpu7x:2x2x1
jax: 0.10.0
libtpu: 0.0.40
codegen_flags: <defaults>
</compile_context>

<pallas_src>
import jax
import jax.numpy as jnp
from jax.experimental import pallas as pl
from jax.experimental.pallas import tpu as pltpu

NUM_CLASSES = 5          # fixed by ExpectationLoss (cls = [[1],[2],[3],[4],[5]])
LANES = 128
DEFAULT_TILE_ROWS = 512  # 512*128 samples/step; ~2 MiB of blocks/step -> fits v5e/v6e/v7x VMEM


def _cdiv(a, b):
    return (a + b - 1) // b


def _make_kernel(alpha: float, beta: float, gamma: float, n_valid: int, num_classes: int):
    inv_n = 1.0 / float(n_valid)

    def kernel(ps_ref, gs_ref, cls_ref, probs_ref, w_ref, out_ref,
               mae_acc, exp_acc, xnum_acc, xden_acc):
        step = pl.program_id(0)

        @pl.when(step == 0)
        def _init():
            mae_acc[...] = jnp.zeros_like(mae_acc)
            exp_acc[...] = jnp.zeros_like(exp_acc)
            xnum_acc[...] = jnp.zeros_like(xnum_acc)
            xden_acc[...] = jnp.zeros_like(xden_acc)

        ps = ps_ref[...].astype(jnp.float32)    # (T, 128)
        gs = gs_ref[...].astype(jnp.float32)    # (T, 128)
        cls = cls_ref[...]                      # (T, 128) int
        # class-major slices, each (T, 128); class reductions are pure VPU elementwise
        p = [probs_ref[c].astype(jnp.float32) for c in range(num_classes)]

        t = ps.shape[0]

        # validity mask for zero-padded samples (global sample index < N)
        row_ids = jax.lax.broadcasted_iota(jnp.int32, (t, LANES), 0)
        lane_ids = jax.lax.broadcasted_iota(jnp.int32, (t, LANES), 1)
        gidx = (step * t + row_ids) * LANES + lane_ids
        valid = (gidx < n_valid).astype(jnp.float32)

        # ---- MAE partial: |pred_score - gt_score|
        mae_acc[...] = mae_acc[...] + jnp.abs(ps - gs) * valid

        # ---- Expectation partial: |sum_c probs[c]*(c+1) - gt_score|
        expect = p[0]
        for c in range(1, num_classes):
            expect = expect + p[c] * float(c + 1)
        exp_acc[...] = exp_acc[...] + jnp.abs(expect - gs) * valid

        # ---- Weighted cross-entropy (probs used as raw logits, as in the module)
        m = p[0]
        for c in range(1, num_classes):
            m = jnp.maximum(m, p[c])
        sum_exp = jnp.exp(p[0] - m)
        for c in range(1, num_classes):
            sum_exp = sum_exp + jnp.exp(p[c] - m)
        lse = jnp.log(sum_exp)                               # log-sum-exp (shifted)

        picked_logit = jnp.zeros_like(ps)
        picked_w = jnp.zeros_like(ps)
        for c in range(num_classes):
            sel = (cls == c).astype(jnp.float32)
            picked_logit = picked_logit + sel * p[c]
            picked_w = picked_w + sel * w_ref[c]             # scalar weight from SMEM
        picked_w = picked_w * valid

        # -log_softmax(probs)[cls] = m + lse - picked_logit
        xnum_acc[...] = xnum_acc[...] + picked_w * (m + lse - picked_logit)
        xden_acc[...] = xden_acc[...] + picked_w

        # ---- epilogue: single cross-lane reduction + single scalar store
        @pl.when(step == pl.num_programs(0) - 1)
        def _finalize():
            mae = jnp.sum(mae_acc[...]) * inv_n
            exp_loss = jnp.sum(exp_acc[...]) * inv_n
            xent = jnp.sum(xnum_acc[...]) / jnp.sum(xden_acc[...])
            out_ref[0, 0] = alpha * mae + beta * exp_loss + gamma * xent

    return kernel


def combined_loss(pred_score, gt_score, pred_probs, pred_cls, gt_cls, xent_weight,
                  alpha=2.0, beta=1.0, gamma=1.0, max_tile_rows=DEFAULT_TILE_ROWS):
    """pred_cls is accepted for API fidelity but (as in the PyTorch module) unused."""
    del pred_cls
    n = pred_probs.shape[0]
    c = pred_probs.shape[1]

    # ---- lane-dense tiling over the batch
    rows = _cdiv(n, LANES)
    if rows <= max_tile_rows:
        tile_rows = rows
        rows_pad = rows
    else:
        assert max_tile_rows % 8 == 0, "multi-step tile must be a multiple of 8 sublanes"
        tile_rows = max_tile_rows
        rows_pad = _cdiv(rows, tile_rows) * tile_rows
    n_pad = rows_pad * LANES
    num_tiles = rows_pad // tile_rows

    def pad1(x):
        x = x.reshape(n)
        return jnp.pad(x, (0, n_pad - n)).reshape(rows_pad, LANES)

    # native-dtype streaming (cast to f32 happens inside the kernel)
    ps = pad1(pred_score)
    gs = pad1(gt_score)
    cls = pad1(gt_cls.astype(jnp.int32))
    probs = jnp.pad(pred_probs, ((0, n_pad - n), (0, 0)))   # (n_pad, C)
    probs = probs.T.reshape(c, rows_pad, LANES)             # class-major, lane-dense
    w = xent_weight.astype(jnp.float32).reshape(c)

    kernel = _make_kernel(float(alpha), float(beta), float(gamma), n, c)

    out = pl.pallas_call(
        kernel,
        out_shape=jax.ShapeDtypeStruct((1, 1), jnp.float32),
        grid=(num_tiles,),
        in_specs=[
            pl.BlockSpec((tile_rows, LANES), lambda i: (i, 0)),      # pred_score
            pl.BlockSpec((tile_rows, LANES), lambda i: (i, 0)),      # gt_score
            pl.BlockSpec((tile_rows, LANES), lambda i: (i, 0)),      # gt_cls
            pl.BlockSpec((c, tile_rows, LANES), lambda i: (0, i, 0)),  # probs (C, rows, 128)
            pl.BlockSpec(memory_space=pltpu.MemorySpace.SMEM),       # class weights
        ],
        out_specs=pl.BlockSpec(memory_space=pltpu.MemorySpace.SMEM),
        scratch_shapes=[pltpu.VMEM((tile_rows, LANES), jnp.float32) for _ in range(4)],
        compiler_params=pltpu.CompilerParams(dimension_semantics=("arbitrary",)),
    )(ps, gs, cls, probs, w)
    return out[0, 0]


def combined_loss_ref(pred_score, gt_score, pred_probs, gt_cls, xent_weight,
                      alpha=2.0, beta=1.0, gamma=1.0):
    """Pure-JAX reference mirroring the PyTorch semantics."""
    n = pred_probs.shape[0]
    mae = jnp.mean(jnp.abs(pred_score - gt_score))
    cls_vals = jnp.arange(1.0, 6.0, dtype=jnp.float32)
    expect = pred_probs @ cls_vals
    exp_loss = jnp.mean(jnp.abs(expect - gt_score))
    logsoft = jax.nn.log_softmax(pred_probs, axis=1)
    picked_lp = logsoft[jnp.arange(n), gt_cls]
    pw = xent_weight[gt_cls]
    xent = jnp.sum(-pw * picked_lp) / jnp.sum(pw)
    return alpha * mae + beta * exp_loss + gamma * xent


if __name__ == "__main__":
    key = jax.random.PRNGKey(0)
    k1, k2, k3, k4 = jax.random.split(key, 4)

    C = NUM_CLASSES
    xent_weight = jnp.array([0.5, 1.0, 1.5, 2.0, 2.5], dtype=jnp.float32)
    alpha, beta, gamma = 2.0, 1.0, 1.0

    # ---- small primary test (batch = 8)
    N = 8
    pred_score = jax.random.uniform(k1, (N,), jnp.float32, minval=1.0, maxval=5.0)
    gt_score = jax.random.uniform(k2, (N,), jnp.float32, minval=1.0, maxval=5.0)
    pred_probs = jax.nn.softmax(jax.random.normal(k3, (N, C), jnp.float32), axis=1)
    pred_cls = jnp.argmax(pred_probs, axis=1).astype(jnp.int32)  # unused (as in the module)
    gt_cls = jax.random.randint(k4, (N,), 0, C, dtype=jnp.int32)

    loss = combined_loss(pred_score, gt_score, pred_probs, pred_cls, gt_cls,
                         xent_weight, alpha, beta, gamma)
    loss = jax.block_until_ready(loss)
    ref = combined_loss_ref(pred_score, gt_score, pred_probs, gt_cls,
                            xent_weight, alpha, beta, gamma)
    assert jnp.allclose(loss, ref, rtol=1e-5, atol=1e-5), (loss, ref)

    # ---- secondary test: multi-step grid + padded lanes (N not a multiple of 128)
    k5, k6, k7, k8 = jax.random.split(jax.random.PRNGKey(1), 4)
    N2 = 3000
    ps2 = jax.random.uniform(k5, (N2,), jnp.float32, minval=1.0, maxval=5.0)
    gs2 = jax.random.uniform(k6, (N2,), jnp.float32, minval=1.0, maxval=5.0)
    probs2 = jax.nn.softmax(jax.random.normal(k7, (N2, C), jnp.float32), axis=1)
    cls2 = jax.random.randint(k8, (N2,), 0, C, dtype=jnp.int32)
    pred_cls2 = jnp.argmax(probs2, axis=1).astype(jnp.int32)

    loss2 = combined_loss(ps2, gs2, probs2, pred_cls2, cls2, xent_weight,
                          alpha, beta, gamma, max_tile_rows=8)
    loss2 = jax.block_until_ready(loss2)
    ref2 = combined_loss_ref(ps2, gs2, probs2, cls2, xent_weight, alpha, beta, gamma)
    assert jnp.allclose(loss2, ref2, rtol=1e-4, atol=1e-4), (loss2, ref2)

    print("KERNEL_OK")
</pallas_src>

<mosaic_0001>
module attributes {stable_mosaic.version = 11 : i64} {
  func.func @kernel(%arg0: i32, %arg1: memref<1x128xf32, #tpu.memory_space<vmem>>, %arg2: memref<1x128xf32, #tpu.memory_space<vmem>>, %arg3: memref<1x128xi32, #tpu.memory_space<vmem>>, %arg4: memref<5x1x128xf32, #tpu.memory_space<vmem>>, %arg5: memref<5xf32, #tpu.memory_space<smem>>, %arg6: memref<1x1xf32, #tpu.memory_space<smem>>, %arg7: memref<1x128xf32, #tpu.memory_space<vmem>>, %arg8: memref<1x128xf32, #tpu.memory_space<vmem>>, %arg9: memref<1x128xf32, #tpu.memory_space<vmem>>, %arg10: memref<1x128xf32, #tpu.memory_space<vmem>>) attributes {dimension_semantics = [#tpu.dimension_semantics<arbitrary>], iteration_bounds = array<i64: 1>, scalar_prefetch = 0 : i64, scratch_operands = 4 : i64, tpu.core_type = #tpu.core_type<tc>, window_params = [{transform_indices = @transform_0, window_bounds = array<i64: 1, 128>}, {transform_indices = @transform_1, window_bounds = array<i64: 1, 128>}, {transform_indices = @transform_2, window_bounds = array<i64: 1, 128>}, {transform_indices = @transform_3, window_bounds = array<i64: 5, 1, 128>}, {transform_indices = @transform_4, window_bounds = array<i64: 5>}, {transform_indices = @transform_5, window_bounds = array<i64: 1, 1>}]} {
    %c0_i32 = arith.constant 0 : i32
    %0 = arith.cmpi eq, %arg0, %c0_i32 : i32
    %1 = arith.extui %0 : i1 to i32
    %c0_i32_0 = arith.constant 0 : i32
    %2 = arith.cmpi ne, %1, %c0_i32_0 : i32
    scf.if %2 {
      %cst_47 = arith.constant 0.000000e+00 : f32
      %136 = vector.broadcast %cst_47 : f32 to vector<1x128xf32>
      %c0_48 = arith.constant 0 : index
      %c0_49 = arith.constant 0 : index
      %137 = vector.load %arg7[%c0_48, %c0_49] : memref<1x128xf32, #tpu.memory_space<vmem>>, vector<1x128xf32>
      tpu.vector_store %arg7[%c0_48, %c0_49], %136 {strides = array<i32>} : memref<1x128xf32, #tpu.memory_space<vmem>>, vector<1x128xf32>,
      %cst_50 = arith.constant 0.000000e+00 : f32
      %138 = vector.broadcast %cst_50 : f32 to vector<1x128xf32>
      %c0_51 = arith.constant 0 : index
      %c0_52 = arith.constant 0 : index
      %139 = vector.load %arg8[%c0_51, %c0_52] : memref<1x128xf32, #tpu.memory_space<vmem>>, vector<1x128xf32>
      tpu.vector_store %arg8[%c0_51, %c0_52], %138 {strides = array<i32>} : memref<1x128xf32, #tpu.memory_space<vmem>>, vector<1x128xf32>,
      %cst_53 = arith.constant 0.000000e+00 : f32
      %140 = vector.broadcast %cst_53 : f32 to vector<1x128xf32>
      %c0_54 = arith.constant 0 : index
      %c0_55 = arith.constant 0 : index
      %141 = vector.load %arg9[%c0_54, %c0_55] : memref<1x128xf32, #tpu.memory_space<vmem>>, vector<1x128xf32>
      tpu.vector_store %arg9[%c0_54, %c0_55], %140 {strides = array<i32>} : memref<1x128xf32, #tpu.memory_space<vmem>>, vector<1x128xf32>,
      %cst_56 = arith.constant 0.000000e+00 : f32
      %142 = vector.broadcast %cst_56 : f32 to vector<1x128xf32>
      %c0_57 = arith.constant 0 : index
      %c0_58 = arith.constant 0 : index
      %143 = vector.load %arg10[%c0_57, %c0_58] : memref<1x128xf32, #tpu.memory_space<vmem>>, vector<1x128xf32>
      tpu.vector_store %arg10[%c0_57, %c0_58], %142 {strides = array<i32>} : memref<1x128xf32, #tpu.memory_space<vmem>>, vector<1x128xf32>,
    } else {
    }
    %c0 = arith.constant 0 : index
    %c0_1 = arith.constant 0 : index
    %3 = vector.load %arg1[%c0, %c0_1] : memref<1x128xf32, #tpu.memory_space<vmem>>, vector<1x128xf32>
    %c0_2 = arith.constant 0 : index
    %c0_3 = arith.constant 0 : index
    %4 = vector.load %arg2[%c0_2, %c0_3] : memref<1x128xf32, #tpu.memory_space<vmem>>, vector<1x128xf32>
    %c0_4 = arith.constant 0 : index
    %c0_5 = arith.constant 0 : index
    %5 = vector.load %arg3[%c0_4, %c0_5] : memref<1x128xi32, #tpu.memory_space<vmem>>, vector<1x128xi32>
    %c0_6 = arith.constant 0 : index
    %c0_7 = arith.constant 0 : index
    %c0_8 = arith.constant 0 : index
    %6 = vector.load %arg4[%c0_6, %c0_7, %c0_8] : memref<5x1x128xf32, #tpu.memory_space<vmem>>, vector<1x1x128xf32>
    %7 = vector.shape_cast %6 : vector<1x1x128xf32> to vector<1x128xf32>
    %c1 = arith.constant 1 : index
    %c0_9 = arith.constant 0 : index
    %c0_10 = arith.constant 0 : index
    %8 = vector.load %arg4[%c1, %c0_9, %c0_10] : memref<5x1x128xf32, #tpu.memory_space<vmem>>, vector<1x1x128xf32>
    %9 = vector.shape_cast %8 : vector<1x1x128xf32> to vector<1x128xf32>
    %c2 = arith.constant 2 : index
    %c0_11 = arith.constant 0 : index
    %c0_12 = arith.constant 0 : index
    %10 = vector.load %arg4[%c2, %c0_11, %c0_12] : memref<5x1x128xf32, #tpu.memory_space<vmem>>, vector<1x1x128xf32>
    %11 = vector.shape_cast %10 : vector<1x1x128xf32> to vector<1x128xf32>
    %c3 = arith.constant 3 : index
    %c0_13 = arith.constant 0 : index
    %c0_14 = arith.constant 0 : index
    %12 = vector.load %arg4[%c3, %c0_13, %c0_14] : memref<5x1x128xf32, #tpu.memory_space<vmem>>, vector<1x1x128xf32>
    %13 = vector.shape_cast %12 : vector<1x1x128xf32> to vector<1x128xf32>
    %c4 = arith.constant 4 : index
    %c0_15 = arith.constant 0 : index
    %c0_16 = arith.constant 0 : index
    %14 = vector.load %arg4[%c4, %c0_15, %c0_16] : memref<5x1x128xf32, #tpu.memory_space<vmem>>, vector<1x1x128xf32>
    %15 = vector.shape_cast %14 : vector<1x1x128xf32> to vector<1x128xf32>
    %16 = tpu.iota {dimensions = array<i32: 0>} : vector<1x128xi32>
    %17 = tpu.iota {dimensions = array<i32: 1>} : vector<1x128xi32>
    %c1_i32 = arith.constant 1 : i32
    %18 = arith.muli %arg0, %c1_i32 : i32
    %19 = vector.broadcast %18 : i32 to vector<1x128xi32>
    %20 = arith.addi %19, %16 : vector<1x128xi32>
    %c128_i32 = arith.constant 128 : i32
    %21 = vector.broadcast %c128_i32 : i32 to vector<1x128xi32>
    %22 = arith.muli %20, %21 : vector<1x128xi32>
    %23 = arith.addi %22, %17 : vector<1x128xi32>
    %c8_i32 = arith.constant 8 : i32
    %24 = vector.broadcast %c8_i32 : i32 to vector<1x128xi32>
    %25 = arith.cmpi slt, %23, %24 : vector<1x128xi32>
    %26 = arith.extui %25 : vector<1x128xi1> to vector<1x128xi32>
    %27 = arith.sitofp %26 : vector<1x128xi32> to vector<1x128xf32>
    %c0_17 = arith.constant 0 : index
    %c0_18 = arith.constant 0 : index
    %28 = vector.load %arg7[%c0_17, %c0_18] : memref<1x128xf32, #tpu.memory_space<vmem>>, vector<1x128xf32>
    %29 = arith.subf %3, %4 : vector<1x128xf32>
    %30 = math.absf %29 : vector<1x128xf32>
    %31 = arith.mulf %30, %27 : vector<1x128xf32>
    %32 = arith.addf %28, %31 : vector<1x128xf32>
    %c0_19 = arith.constant 0 : index
    %c0_20 = arith.constant 0 : index
    %33 = vector.load %arg7[%c0_19, %c0_20] : memref<1x128xf32, #tpu.memory_space<vmem>>, vector<1x128xf32>
    tpu.vector_store %arg7[%c0_19, %c0_20], %32 {strides = array<i32>} : memref<1x128xf32, #tpu.memory_space<vmem>>, vector<1x128xf32>,
    %cst = arith.constant 2.000000e+00 : f32
    %34 = vector.broadcast %cst : f32 to vector<1x128xf32>
    %35 = arith.mulf %9, %34 : vector<1x128xf32>
    %36 = arith.addf %7, %35 : vector<1x128xf32>
    %cst_21 = arith.constant 3.000000e+00 : f32
    %37 = vector.broadcast %cst_21 : f32 to vector<1x128xf32>
    %38 = arith.mulf %11, %37 : vector<1x128xf32>
    %39 = arith.addf %36, %38 : vector<1x128xf32>
    %cst_22 = arith.constant 4.000000e+00 : f32
    %40 = vector.broadcast %cst_22 : f32 to vector<1x128xf32>
    %41 = arith.mulf %13, %40 : vector<1x128xf32>
    %42 = arith.addf %39, %41 : vector<1x128xf32>
    %cst_23 = arith.constant 5.000000e+00 : f32
    %43 = vector.broadcast %cst_23 : f32 to vector<1x128xf32>
    %44 = arith.mulf %15, %43 : vector<1x128xf32>
    %45 = arith.addf %42, %44 : vector<1x128xf32>
    %c0_24 = arith.constant 0 : index
    %c0_25 = arith.constant 0 : index
    %46 = vector.load %arg8[%c0_24, %c0_25] : memref<1x128xf32, #tpu.memory_space<vmem>>, vector<1x128xf32>
    %47 = arith.subf %45, %4 : vector<1x128xf32>
    %48 = math.absf %47 : vector<1x128xf32>
    %49 = arith.mulf %48, %27 : vector<1x128xf32>
    %50 = arith.addf %46, %49 : vector<1x128xf32>
    %c0_26 = arith.constant 0 : index
    %c0_27 = arith.constant 0 : index
    %51 = vector.load %arg8[%c0_26, %c0_27] : memref<1x128xf32, #tpu.memory_space<vmem>>, vector<1x128xf32>
    tpu.vector_store %arg8[%c0_26, %c0_27], %50 {strides = array<i32>} : memref<1x128xf32, #tpu.memory_space<vmem>>, vector<1x128xf32>,
    %52 = arith.maximumf %7, %9 : vector<1x128xf32>
    %53 = arith.maximumf %52, %11 : vector<1x128xf32>
    %54 = arith.maximumf %53, %13 : vector<1x128xf32>
    %55 = arith.maximumf %54, %15 : vector<1x128xf32>
    %56 = arith.subf %7, %55 : vector<1x128xf32>
    %57 = math.exp %56 : vector<1x128xf32>
    %58 = arith.subf %9, %55 : vector<1x128xf32>
    %59 = math.exp %58 : vector<1x128xf32>
    %60 = arith.addf %57, %59 : vector<1x128xf32>
    %61 = arith.subf %11, %55 : vector<1x128xf32>
    %62 = math.exp %61 : vector<1x128xf32>
    %63 = arith.addf %60, %62 : vector<1x128xf32>
    %64 = arith.subf %13, %55 : vector<1x128xf32>
    %65 = math.exp %64 : vector<1x128xf32>
    %66 = arith.addf %63, %65 : vector<1x128xf32>
    %67 = arith.subf %15, %55 : vector<1x128xf32>
    %68 = math.exp %67 : vector<1x128xf32>
    %69 = arith.addf %66, %68 : vector<1x128xf32>
    %70 = math.log %69 : vector<1x128xf32>
    %cst_28 = arith.constant 0.000000e+00 : f32
    %71 = vector.broadcast %cst_28 : f32 to vector<1x128xf32>
    %cst_29 = arith.constant 0.000000e+00 : f32
    %72 = vector.broadcast %cst_29 : f32 to vector<1x128xf32>
    %c0_i32_30 = arith.constant 0 : i32
    %73 = vector.broadcast %c0_i32_30 : i32 to vector<1x128xi32>
    %74 = arith.cmpi eq, %5, %73 : vector<1x128xi32>
    %75 = arith.extui %74 : vector<1x128xi1> to vector<1x128xi32>
    %76 = arith.sitofp %75 : vector<1x128xi32> to vector<1x128xf32>
    %77 = arith.mulf %76, %7 : vector<1x128xf32>
    %78 = arith.addf %71, %77 : vector<1x128xf32>
    %c0_31 = arith.constant 0 : index
    %79 = memref.load %arg5[%c0_31] : memref<5xf32, #tpu.memory_space<smem>>
    %80 = vector.broadcast %79 : f32 to vector<1x128xf32>
    %81 = arith.mulf %76, %80 : vector<1x128xf32>
    %82 = arith.addf %72, %81 : vector<1x128xf32>
    %c1_i32_32 = arith.constant 1 : i32
    %83 = vector.broadcast %c1_i32_32 : i32 to vector<1x128xi32>
    %84 = arith.cmpi eq, %5, %83 : vector<1x128xi32>
    %85 = arith.extui %84 : vector<1x128xi1> to vector<1x128xi32>
    %86 = arith.sitofp %85 : vector<1x128xi32> to vector<1x128xf32>
    %87 = arith.mulf %86, %9 : vector<1x128xf32>
    %88 = arith.addf %78, %87 : vector<1x128xf32>
    %c1_33 = arith.constant 1 : index
    %89 = memref.load %arg5[%c1_33] : memref<5xf32, #tpu.memory_space<smem>>
    %90 = vector.broadcast %89 : f32 to vector<1x128xf32>
    %91 = arith.mulf %86, %90 : vector<1x128xf32>
    %92 = arith.addf %82, %91 : vector<1x128xf32>
    %c2_i32 = arith.constant 2 : i32
    %93 = vector.broadcast %c2_i32 : i32 to vector<1x128xi32>
    %94 = arith.cmpi eq, %5, %93 : vector<1x128xi32>
    %95 = arith.extui %94 : vector<1x128xi1> to vector<1x128xi32>
    %96 = arith.sitofp %95 : vector<1x128xi32> to vector<1x128xf32>
    %97 = arith.mulf %96, %11 : vector<1x128xf32>
    %98 = arith.addf %88, %97 : vector<1x128xf32>
    %c2_34 = arith.constant 2 : index
    %99 = memref.load %arg5[%c2_34] : memref<5xf32, #tpu.memory_space<smem>>
    %100 = vector.broadcast %99 : f32 to vector<1x128xf32>
    %101 = arith.mulf %96, %100 : vector<1x128xf32>
    %102 = arith.addf %92, %101 : vector<1x128xf32>
    %c3_i32 = arith.constant 3 : i32
    %103 = vector.broadcast %c3_i32 : i32 to vector<1x128xi32>
    %104 = arith.cmpi eq, %5, %103 : vector<1x128xi32>
    %105 = arith.extui %104 : vector<1x128xi1> to vector<1x128xi32>
    %106 = arith.sitofp %105 : vector<1x128xi32> to vector<1x128xf32>
    %107 = arith.mulf %106, %13 : vector<1x128xf32>
    %108 = arith.addf %98, %107 : vector<1x128xf32>
    %c3_35 = arith.constant 3 : index
    %109 = memref.load %arg5[%c3_35] : memref<5xf32, #tpu.memory_space<smem>>
    %110 = vector.broadcast %109 : f32 to vector<1x128xf32>
    %111 = arith.mulf %106, %110 : vector<1x128xf32>
    %112 = arith.addf %102, %111 : vector<1x128xf32>
    %c4_i32 = arith.constant 4 : i32
    %113 = vector.broadcast %c4_i32 : i32 to vector<1x128xi32>
    %114 = arith.cmpi eq, %5, %113 : vector<1x128xi32>
    %115 = arith.extui %114 : vector<1x128xi1> to vector<1x128xi32>
    %116 = arith.sitofp %115 : vector<1x128xi32> to vector<1x128xf32>
    %117 = arith.mulf %116, %15 : vector<1x128xf32>
    %118 = arith.addf %108, %117 : vector<1x128xf32>
    %c4_36 = arith.constant 4 : index
    %119 = memref.load %arg5[%c4_36] : memref<5xf32, #tpu.memory_space<smem>>
    %120 = vector.broadcast %119 : f32 to vector<1x128xf32>
    %121 = arith.mulf %116, %120 : vector<1x128xf32>
    %122 = arith.addf %112, %121 : vector<1x128xf32>
    %123 = arith.mulf %122, %27 : vector<1x128xf32>
    %c0_37 = arith.constant 0 : index
    %c0_38 = arith.constant 0 : index
    %124 = vector.load %arg9[%c0_37, %c0_38] : memref<1x128xf32, #tpu.memory_space<vmem>>, vector<1x128xf32>
    %125 = arith.addf %55, %70 : vector<1x128xf32>
    %126 = arith.subf %125, %118 : vector<1x128xf32>
    %127 = arith.mulf %123, %126 : vector<1x128xf32>
    %128 = arith.addf %124, %127 : vector<1x128xf32>
    %c0_39 = arith.constant 0 : index
    %c0_40 = arith.constant 0 : index
    %129 = vector.load %arg9[%c0_39, %c0_40] : memref<1x128xf32, #tpu.memory_space<vmem>>, vector<1x128xf32>
    tpu.vector_store %arg9[%c0_39, %c0_40], %128 {strides = array<i32>} : memref<1x128xf32, #tpu.memory_space<vmem>>, vector<1x128xf32>,
    %c0_41 = arith.constant 0 : index
    %c0_42 = arith.constant 0 : index
    %130 = vector.load %arg10[%c0_41, %c0_42] : memref<1x128xf32, #tpu.memory_space<vmem>>, vector<1x128xf32>
    %131 = arith.addf %130, %123 : vector<1x128xf32>
    %c0_43 = arith.constant 0 : index
    %c0_44 = arith.constant 0 : index
    %132 = vector.load %arg10[%c0_43, %c0_44] : memref<1x128xf32, #tpu.memory_space<vmem>>, vector<1x128xf32>
    tpu.vector_store %arg10[%c0_43, %c0_44], %131 {strides = array<i32>} : memref<1x128xf32, #tpu.memory_space<vmem>>, vector<1x128xf32>,
    %c0_i32_45 = arith.constant 0 : i32
    %133 = arith.cmpi eq, %arg0, %c0_i32_45 : i32
    %134 = arith.extui %133 : i1 to i32
    %c0_i32_46 = arith.constant 0 : i32
    %135 = arith.cmpi ne, %134, %c0_i32_46 : i32
    scf.if %135 {
      %c0_47 = arith.constant 0 : index
      %c0_48 = arith.constant 0 : index
      %136 = vector.load %arg7[%c0_47, %c0_48] : memref<1x128xf32, #tpu.memory_space<vmem>>, vector<1x128xf32>
      %137 = vector.shape_cast %136 : vector<1x128xf32> to vector<1x1x128xf32>
      %cst_49 = arith.constant dense<0.000000e+00> : vector<1xf32>
      %138 = vector.multi_reduction <add>, %137, %cst_49 [1, 2] : vector<1x1x128xf32> to vector<1xf32>
      %139 = vector.shape_cast %138 : vector<1xf32> to vector<1x1x1xf32>
      %140 = vector.extract %139[0, 0, 0] : f32 from vector<1x1x1xf32>
      %cst_50 = arith.constant 1.250000e-01 : f32
      %141 = arith.mulf %140, %cst_50 : f32
      %c0_51 = arith.constant 0 : index
      %c0_52 = arith.constant 0 : index
      %142 = vector.load %arg8[%c0_51, %c0_52] : memref<1x128xf32, #tpu.memory_space<vmem>>, vector<1x128xf32>
      %143 = vector.shape_cast %142 : vector<1x128xf32> to vector<1x1x128xf32>
      %cst_53 = arith.constant dense<0.000000e+00> : vector<1xf32>
      %144 = vector.multi_reduction <add>, %143, %cst_53 [1, 2] : vector<1x1x128xf32> to vector<1xf32>
      %145 = vector.shape_cast %144 : vector<1xf32> to vector<1x1x1xf32>
      %146 = vector.extract %145[0, 0, 0] : f32 from vector<1x1x1xf32>
      %cst_54 = arith.constant 1.250000e-01 : f32
      %147 = arith.mulf %146, %cst_54 : f32
      %c0_55 = arith.constant 0 : index
      %c0_56 = arith.constant 0 : index
      %148 = vector.load %arg9[%c0_55, %c0_56] : memref<1x128xf32, #tpu.memory_space<vmem>>, vector<1x128xf32>
      %149 = vector.shape_cast %148 : vector<1x128xf32> to vector<1x1x128xf32>
      %cst_57 = arith.constant dense<0.000000e+00> : vector<1xf32>
      %150 = vector.multi_reduction <add>, %149, %cst_57 [1, 2] : vector<1x1x128xf32> to vector<1xf32>
      %151 = vector.shape_cast %150 : vector<1xf32> to vector<1x1x1xf32>
      %152 = vector.extract %151[0, 0, 0] : f32 from vector<1x1x1xf32>
      %c0_58 = arith.constant 0 : index
      %c0_59 = arith.constant 0 : index
      %153 = vector.load %arg10[%c0_58, %c0_59] : memref<1x128xf32, #tpu.memory_space<vmem>>, vector<1x128xf32>
      %154 = vector.shape_cast %153 : vector<1x128xf32> to vector<1x1x128xf32>
      %cst_60 = arith.constant dense<0.000000e+00> : vector<1xf32>
      %155 = vector.multi_reduction <add>, %154, %cst_60 [1, 2] : vector<1x1x128xf32> to vector<1xf32>
      %156 = vector.shape_cast %155 : vector<1xf32> to vector<1x1x1xf32>
      %157 = vector.extract %156[0, 0, 0] : f32 from vector<1x1x1xf32>
      %158 = arith.divf %152, %157 : f32
      %cst_61 = arith.constant 2.000000e+00 : f32
      %159 = arith.mulf %cst_61, %141 : f32
      %cst_62 = arith.constant 1.000000e+00 : f32
      %160 = arith.mulf %cst_62, %147 : f32
      %161 = arith.addf %159, %160 : f32
      %cst_63 = arith.constant 1.000000e+00 : f32
      %162 = arith.mulf %cst_63, %158 : f32
      %163 = arith.addf %161, %162 : f32
      %c0_64 = arith.constant 0 : index
      %c0_65 = arith.constant 0 : index
      %164 = memref.load %arg6[%c0_64, %c0_65] : memref<1x1xf32, #tpu.memory_space<smem>>
      memref.store %163, %arg6[%c0_64, %c0_65] : memref<1x1xf32, #tpu.memory_space<smem>>
    } else {
    }
    return
  }
  func.func @transform_0(%arg0: i32) -> (i32, i32) {
    %c0_i32 = arith.constant 0 : i32
    %c0_i32_0 = arith.constant 0 : i32
    return %arg0, %c0_i32 : i32, i32
  }
  func.func @transform_1(%arg0: i32) -> (i32, i32) {
    %c0_i32 = arith.constant 0 : i32
    %c0_i32_0 = arith.constant 0 : i32
    return %arg0, %c0_i32 : i32, i32
  }
  func.func @transform_2(%arg0: i32) -> (i32, i32) {
    %c0_i32 = arith.constant 0 : i32
    %c0_i32_0 = arith.constant 0 : i32
    return %arg0, %c0_i32 : i32, i32
  }
  func.func @transform_3(%arg0: i32) -> (i32, i32, i32) {
    %c0_i32 = arith.constant 0 : i32
    %c0_i32_0 = arith.constant 0 : i32
    %c0_i32_1 = arith.constant 0 : i32
    return %c0_i32, %arg0, %c0_i32_0 : i32, i32, i32
  }
  func.func @transform_4(%arg0: i32) -> i32 {
    %c0_i32 = arith.constant 0 : i32
    %c0_i32_0 = arith.constant 0 : i32
    return %c0_i32 : i32
  }
  func.func @transform_5(%arg0: i32) -> (i32, i32) {
    %c0_i32 = arith.constant 0 : i32
    %c0_i32_0 = arith.constant 0 : i32
    %c0_i32_1 = arith.constant 0 : i32
    return %c0_i32, %c0_i32_0 : i32, i32
  }
}

</mosaic_0001>

<llo_original>
// kernel: tpu_custom_call.1
$region0: #{tpu_custom_call.1}
  #allocation0 [shape = 'u32[]', space=smem, size = 0x4, offset = 0x4, fixed_abs, tag = 'smem constant byte address 0x4 - core index']
  #allocation1 [shape = 'u32[144,128]{1,0:T(1,128)}', space=vmem, size = 0x12000, scoped, tag = 'internal scratch']
  #allocation2 [shape = 'f32[1,128]{1,0:T(1,128)}', space=vmem, size = 0x200, scoped, tag = 'scratch operand']
  #allocation3 [shape = 'f32[1,128]{1,0:T(1,128)}', space=vmem, size = 0x200, scoped, tag = 'scratch operand']
  #allocation4 [shape = 'f32[1,128]{1,0:T(1,128)}', space=vmem, size = 0x200, scoped, tag = 'scratch operand']
  #allocation5 [shape = 'f32[1,128]{1,0:T(1,128)}', space=vmem, size = 0x200, scoped, tag = 'scratch operand']
  %s0 = inlined_call_operand.hbm [shape: f32[1,128], index: 0, kind: input, shape index: {}]
  %s1 = inlined_call_operand.vmem [shape: f32[1,128], index: 1, kind: input, shape index: {}]
  %s2 = inlined_call_operand.vmem [shape: s32[1,128], index: 2, kind: input, shape index: {}]
  %s3 = inlined_call_operand.vmem [shape: f32[5,1,128], index: 3, kind: input, shape index: {}]
  %s4 = inlined_call_operand.vmem [shape: f32[5], index: 4, kind: input, shape index: {}]
  %s5 = inlined_call_operand.hbm [shape: f32[1,1], index: 5, kind: output, shape index: {}]
  %s6 = sld [smem:[#allocation0]]
  $region46: #{tpu_custom_call.1} parent=0
    _
  %s8 = ssub.s32 1, %s6
  %s9 = scalar_select 0, %s8, %s6
  $region1: #{tpu_custom_call.1} parent=0
    #allocation6 [shape = 'u8[512]{0}', space=vmem, size = 0x400, scoped, tag = 'input window, operand 0, single buffered']
    #allocation7 [shape = 's32[1]{0}', space=sflag, size = 0x4, scoped, tag = 'scoped memory for tpu_custom_call.1']
    #allocation8 [shape = 's32[1]{0}', space=sflag, size = 0x4, scoped, tag = 'scoped memory for tpu_custom_call.1']
    #allocation9 [shape = 's32[1]{0}', space=sflag, size = 0x4, scoped, tag = 'scoped memory for tpu_custom_call.1']
    #allocation10 [shape = 'u8[512]{0}', space=smem, size = 0x200, scoped, tag = 'input window, operand 4, single buffered']
    #allocation11 [shape = 'u8[512]{0}', space=smem, size = 0x200, scoped, tag = 'output window, operand 0, single buffered']
    %10 = vsyncpa [#allocation7], 0
    %11 = vsyncpa [#allocation9], 0
    %12 = vsyncpa [#allocation8], 0
    // Predicated region
    $region2: #{tpu_custom_call.1} parent=1 // pred_check
      _
    $region3: #{tpu_custom_call.1} parent=1 // pred_check_branch
      %14 = sbr.rel (0) target = $region5
    $region4: #{tpu_custom_call.1} parent=1 // pred_region
      %s16 = ssub.s32 16, 16
      %17 = vsyncadd [#allocation7], %s16
      %s19 = sshll.u32 [#allocation6], 4
      %s20 = int_to_ptr.vmem [resolvable:$true] %s19
      %22 = dma.hbm_to_vmem [thread:$0]  %s0, 16, %s20, [#allocation7]
    $region5: #{tpu_custom_call.1} parent=1 // pred_fallthru
      _
    // Predicated region
    $region6: #{tpu_custom_call.1} parent=1 // pred_check
      _
    $region7: #{tpu_custom_call.1} parent=1 // pred_check_branch
      %24 = sbr.rel (0) target = $region9
    $region8: #{tpu_custom_call.1} parent=1 // pred_region
      _
    $region9: #{tpu_custom_call.1} parent=1 // pred_fallthru
      _
    // Predicated region
    $region10: #{tpu_custom_call.1} parent=1 // pred_check
      _
    $region11: #{tpu_custom_call.1} parent=1 // pred_check_branch
      %26 = sbr.rel (0) target = $region13
    $region12: #{tpu_custom_call.1} parent=1 // pred_region
      _
    $region13: #{tpu_custom_call.1} parent=1 // pred_fallthru
      _
    // Predicated region
    $region14: #{tpu_custom_call.1} parent=1 // pred_check
      _
    $region15: #{tpu_custom_call.1} parent=1 // pred_check_branch
      %28 = sbr.rel (0) target = $region17
    $region16: #{tpu_custom_call.1} parent=1 // pred_region
      _
    $region17: #{tpu_custom_call.1} parent=1 // pred_fallthru
      _
    // Predicated region
    $region18: #{tpu_custom_call.1} parent=1 // pred_check
      _
    $region19: #{tpu_custom_call.1} parent=1 // pred_check_branch
      %30 = sbr.rel (0) target = $region21
    $region20: #{tpu_custom_call.1} parent=1 // pred_region
      %s32 = ssub.s32 16, 16
      %33 = vsyncadd [#allocation9], %s32
      %s35 = sshll.u32 %s4, 4
      %s36 = int_to_ptr.vmem [resolvable:$true] %s35
      %38 = dma.vmem_to_smem %s36, 16, [#allocation10], [#allocation9]
    $region21: #{tpu_custom_call.1} parent=1 // pred_fallthru
      _
    // Predicated region
    $region22: #{tpu_custom_call.1} parent=1 // pred_check
      _
    $region23: #{tpu_custom_call.1} parent=1 // pred_check_branch
      %40 = sbr.rel (0) target = $region25
    $region24: #{tpu_custom_call.1} parent=1 // pred_region
      %41 = dma.done [#allocation7], 16
    $region25: #{tpu_custom_call.1} parent=1 // pred_fallthru
      _
    // Predicated region
    $region26: #{tpu_custom_call.1} parent=1 // pred_check
      _
    $region27: #{tpu_custom_call.1} parent=1 // pred_check_branch
      %43 = sbr.rel (0) target = $region29
    $region28: #{tpu_custom_call.1} parent=1 // pred_region
      %44 = dma.done [#allocation9], 16
    $region29: #{tpu_custom_call.1} parent=1 // pred_fallthru
      _
    %45 = sfence
    %p46 = scmp.eq.s32.totalorder 0, 0
    // Predicated region
    $region30: #{tpu_custom_call.1} parent=1 // pred_check
      %p47 = pneg %p46
    $region31: #{tpu_custom_call.1} parent=1 // pred_check_branch
      %49 = sbr.rel (%p47) target = $region33
    $region32: #{tpu_custom_call.1} parent=1 // pred_region
      %50 = vst [vmem:[#allocation2] sm:$0x1] 0.0
      %51 = vst [vmem:[#allocation3] sm:$0x1] 0.0
      %52 = vst [vmem:[#allocation4] sm:$0x1] 0.0
      %53 = vst [vmem:[#allocation5] sm:$0x1] 0.0
    $region33: #{tpu_custom_call.1} parent=1 // pred_fallthru
      _
    %v54 = vld [vmem:[#allocation6] sm:$0x1]
    %v55 = vld [vmem:[%s1] sm:$0x1]
    %v56 = vld [vmem:[%s2] sm:$0x1]
    %v57 = vld [vmem:[%s3] sm:$0x1]
    %s58 = scalar_lea.vmem %s3, 1
    %v59 = vld [vmem:[%s58] sm:$0x1]
    %s60 = scalar_lea.vmem %s3, 2
    %v61 = vld [vmem:[%s60] sm:$0x1]
    %s62 = scalar_lea.vmem %s3, 3
    %v63 = vld [vmem:[%s62] sm:$0x1]
    %s64 = scalar_lea.vmem %s3, 4
    %v65 = vld [vmem:[%s64] sm:$0x1]
    %v66 = vlaneseq
    %v67 = vshrl.u32 %v66, 7
    %v68 = vlaneseq
    %v69 = vand.u32 %v68, 127
    %v70 = vstv 0
    %v71 = vadd.s32 %v70, %v67
    %v72 = vmul.u32 %v71, 128
    %v73 = vadd.s32 %v72, %v69
    %vm74 = vcmp.lt.s32.totalorder %v73, 8
    %v75 = vsel %vm74, 1, 0
    %v76 = vcvt.s32.f32 %v75
    %v77 = vld [vmem:[#allocation2] sm:$0x1]
    %v78 = vsub.f32 %v54, %v55
    %v79 = vand.u32 2147483647, %v78
    %v80 = vmul.f32 %v79, %v76
    %v81 = vadd.f32 %v77, %v80
    %82 = vst [vmem:[#allocation2] sm:$0x1] %v81
    %v83 = vmul.f32 %v59, 2.0
    %v84 = vadd.f32 %v57, %v83
    %v85 = vmul.f32 %v61, 3.0
    %v86 = vadd.f32 %v84, %v85
    %v87 = vmul.f32 %v63, 4.0
    %v88 = vadd.f32 %v86, %v87
    %v89 = vmul.f32 %v65, 5.0
    %v90 = vadd.f32 %v88, %v89
    %v91 = vld [vmem:[#allocation3] sm:$0x1]
    %v92 = vsub.f32 %v90, %v55
    %v93 = vand.u32 2147483647, %v92
    %v94 = vmul.f32 %v93, %v76
    %v95 = vadd.f32 %v91, %v94
    %96 = vst [vmem:[#allocation3] sm:$0x1] %v95
    %v97 = vmax.f32 %v57, %v59
    %v98 = vmax.f32 %v97, %v61
    %v99 = vmax.f32 %v98, %v63
    %v100 = vmax.f32 %v99, %v65
    %v101 = vsub.f32 %v57, %v100
    %v102 = vmul.f32 %v101, 1.442695
    %v103 = vpow.pop %v102
    %v104 = vsub.f32 %v59, %v100
    %v105 = vmul.f32 %v104, 1.442695
    %v106 = vpow.pop %v105
    %v107 = vadd.f32 %v103, %v106
    %v108 = vsub.f32 %v61, %v100
    %v109 = vmul.f32 %v108, 1.442695
    %v110 = vpow.pop %v109
    %v111 = vadd.f32 %v107, %v110
    %v112 = vsub.f32 %v63, %v100
    %v113 = vmul.f32 %v112, 1.442695
    %v114 = vpow.pop %v113
    %v115 = vadd.f32 %v111, %v114
    %v116 = vsub.f32 %v65, %v100
    %v117 = vmul.f32 %v116, 1.442695
    %v118 = vpow.pop %v117
    %v119 = vadd.f32 %v115, %v118
    %v120 = vlog2.pop %v119
    %v121 = vmul.f32 %v120, 0.6931472
    %vm122 = vcmp.eq.s32.totalorder %v56, 0
    %v123 = vsel %vm122, 1, 0
    %v124 = vcvt.s32.f32 %v123
    %v125 = vmul.f32 %v124, %v57
    %v126 = vadd.f32 %v125, 0.0
    %s127 = sld [smem:[#allocation10]]
    %v128 = vstv %s127
    %v129 = vmul.f32 %v124, %v128
    %v130 = vadd.f32 %v129, 0.0
    %vm131 = vcmp.eq.s32.totalorder %v56, 1
    %v132 = vsel %vm131, 1, 0
    %v133 = vcvt.s32.f32 %v132
    %v134 = vmul.f32 %v133, %v59
    %v135 = vadd.f32 %v126, %v134
    %s136 = sld [smem:[#allocation10 + $0x1]]
    %v137 = vstv %s136
    %v138 = vmul.f32 %v133, %v137
    %v139 = vadd.f32 %v130, %v138
    %vm140 = vcmp.eq.s32.totalorder %v56, 2
    %v141 = vsel %vm140, 1, 0
    %v142 = vcvt.s32.f32 %v141
    %v143 = vmul.f32 %v142, %v61
    %v144 = vadd.f32 %v135, %v143
    %s145 = sld [smem:[#allocation10 + $0x2]]
    %v146 = vstv %s145
    %v147 = vmul.f32 %v142, %v146
    %v148 = vadd.f32 %v139, %v147
    %vm149 = vcmp.eq.s32.totalorder %v56, 3
    %v150 = vsel %vm149, 1, 0
    %v151 = vcvt.s32.f32 %v150
    %v152 = vmul.f32 %v151, %v63
    %v153 = vadd.f32 %v144, %v152
    %s154 = sld [smem:[#allocation10 + $0x3]]
    %v155 = vstv %s154
    %v156 = vmul.f32 %v151, %v155
    %v157 = vadd.f32 %v148, %v156
    %vm158 = vcmp.eq.s32.totalorder %v56, 4
    %v159 = vsel %vm158, 1, 0
    %v160 = vcvt.s32.f32 %v159
    %v161 = vmul.f32 %v160, %v65
    %v162 = vadd.f32 %v153, %v161
    %s163 = sld [smem:[#allocation10 + $0x4]]
    %v164 = vstv %s163
    %v165 = vmul.f32 %v160, %v164
    %v166 = vadd.f32 %v157, %v165
    %v167 = vmul.f32 %v166, %v76
    %v168 = vld [vmem:[#allocation4] sm:$0x1]
    %v169 = vadd.f32 %v100, %v121
    %v170 = vsub.f32 %v169, %v162
    %v171 = vmul.f32 %v167, %v170
    %v172 = vadd.f32 %v168, %v171
    %173 = vst [vmem:[#allocation4] sm:$0x1] %v172
    %v174 = vld [vmem:[#allocation5] sm:$0x1]
    %v175 = vadd.f32 %v174, %v167
    %176 = vst [vmem:[#allocation5] sm:$0x1] %v175
    // Predicated region
    $region34: #{tpu_custom_call.1} parent=1 // pred_check
      %p177 = pneg %p46
    $region35: #{tpu_custom_call.1} parent=1 // pred_check_branch
      %179 = sbr.rel (%p177) target = $region37
    $region36: #{tpu_custom_call.1} parent=1 // pred_region
      %v180 = vld [vmem:[#allocation2] sm:$0x1]
      %vm181 = vcmask 1040384
      %v182 = vsel %vm181, %v180, 0.0
      %183 = vadd.xlane.f32.xlu0 %v182
      %v184 = vpop.xlane.xlu0 %183
      %v185 = vrot.slane %v184, 4
      %v186 = vadd.f32 %v184, %v185
      %v187 = vrot.slane %v186, 2
      %v188 = vadd.f32 %v186, %v187
      %v189 = vrot.slane %v188, 1
      %v190 = vadd.f32 %v188, %v189
      %s191 = vtos %v190
      %s192 = smul.f32 %s191, 0.125
      %v193 = vld [vmem:[#allocation3] sm:$0x1]
      %v194 = vsel %vm181, %v193, 0.0
      %195 = vadd.xlane.f32.xlu0 %v194
      %v196 = vpop.xlane.xlu0 %195
      %v197 = vrot.slane %v196, 4
      %v198 = vadd.f32 %v196, %v197
      %v199 = vrot.slane %v198, 2
      %v200 = vadd.f32 %v198, %v199
      %v201 = vrot.slane %v200, 1
      %v202 = vadd.f32 %v200, %v201
      %s203 = vtos %v202
      %s204 = smul.f32 %s203, 0.125
      %v205 = vld [vmem:[#allocation4] sm:$0x1]
      %v206 = vsel %vm181, %v205, 0.0
      %207 = vadd.xlane.f32.xlu0 %v206
      %v208 = vpop.xlane.xlu0 %207
      %v209 = vrot.slane %v208, 4
      %v210 = vadd.f32 %v208, %v209
      %v211 = vrot.slane %v210, 2
      %v212 = vadd.f32 %v210, %v211
      %v213 = vrot.slane %v212, 1
      %v214 = vadd.f32 %v212, %v213
      %s215 = vtos %v214
      %v216 = vld [vmem:[#allocation5] sm:$0x1]
      %v217 = vsel %vm181, %v216, 0.0
      %218 = vadd.xlane.f32.xlu0 %v217
      %v219 = vpop.xlane.xlu0 %218
      %v220 = vrot.slane %v219, 4
      %v221 = vadd.f32 %v219, %v220
      %v222 = vrot.slane %v221, 2
      %v223 = vadd.f32 %v221, %v222
      %v224 = vrot.slane %v223, 1
      %v225 = vadd.f32 %v223, %v224
      %s226 = vtos %v225
      %v227 = vstv %s226
      %v228 = vrcp.pop %v227
      %s229 = vtos %v228
      %s230 = smul.f32 %s215, %s229
      %s231 = smul.f32 %s192, 2.0
      %s232 = sadd.f32 %s231, %s204
      %s233 = sadd.f32 %s232, %s230
      %s234 = scalar_lea.smem [#allocation11], 0
      %235 = sst [smem:[%s234]] %s233
    $region37: #{tpu_custom_call.1} parent=1 // pred_fallthru
      _
    // Predicated region
    $region38: #{tpu_custom_call.1} parent=1 // pred_check
      _
    $region39: #{tpu_custom_call.1} parent=1 // pred_check_branch
      %237 = sbr.rel (0) target = $region41
    $region40: #{tpu_custom_call.1} parent=1 // pred_region
      %s239 = ssub.s32 16, 16
      %240 = vsyncadd [#allocation8], %s239
      %243 = dma.smem_to_hbm [#allocation11], 16, %s5, [#allocation8]
    $region41: #{tpu_custom_call.1} parent=1 // pred_fallthru
      _
    // Predicated region
    $region42: #{tpu_custom_call.1} parent=1 // pred_check
      _
    $region43: #{tpu_custom_call.1} parent=1 // pred_check_branch
      %245 = sbr.rel (0) target = $region45
    $region44: #{tpu_custom_call.1} parent=1 // pred_region
      %246 = dma.done [#allocation8], 16
    $region45: #{tpu_custom_call.1} parent=1 // pred_fallthru
      _
    %247 = sfence
    %248 = vsyncpa [#allocation7], 1
    %249 = vsyncpa [#allocation8], 1
    %250 = vsyncpa [#allocation9], 1

</llo_original>
